<compile_context>
chip_gen: v7x
topology: tpu7x:2x2x1
jax: 0.10.0
libtpu: 0.0.40
codegen_flags: <defaults>
</compile_context>

<pallas_src>
import math
from functools import lru_cache, partial

import numpy as np
import jax
import jax.numpy as jnp
from jax.experimental import pallas as pl
from jax.experimental.pallas import tpu as pltpu


# ----------------------------------------------------------------------------
# Host-side glue: RandomResizedCrop.get_params with a deterministic numpy RNG.
# NOTE: faithful to the reference module, which reads width = shape[2],
# height = shape[3] (swapped vs. NCHW for rectangular images; identical for
# square inputs).
# ----------------------------------------------------------------------------
def get_params(img_shape, scale, ratio, rng):
    width, height = img_shape[2], img_shape[3]
    area = height * width
    log_ratio = (math.log(ratio[0]), math.log(ratio[1]))
    for _ in range(10):
        target_area = area * float(rng.uniform(scale[0], scale[1]))
        aspect_ratio = math.exp(float(rng.uniform(log_ratio[0], log_ratio[1])))
        w = int(round(math.sqrt(target_area * aspect_ratio)))
        h = int(round(math.sqrt(target_area / aspect_ratio)))
        if 0 < w <= width and 0 < h <= height:
            i = int(rng.integers(0, height - h + 1))
            j = int(rng.integers(0, width - w + 1))
            return i, j, h, w
    # fallback (center crop)
    in_ratio = float(width) / float(height)
    if in_ratio < min(ratio):
        w = width
        h = int(round(w / min(ratio)))
    elif in_ratio > max(ratio):
        h = height
        w = int(round(h * max(ratio)))
    else:
        w = width
        h = height
    i = (height - h) // 2
    j = (width - w) // 2
    return i, j, h, w


@lru_cache(maxsize=None)
def _bilinear_weight_matrix(in_size, out_size):
    """(out_size, in_size) PyTorch bilinear weights, align_corners=False."""
    W = np.zeros((out_size, in_size), dtype=np.float32)
    scale = in_size / out_size
    for o in range(out_size):
        src = scale * (o + 0.5) - 0.5
        if src < 0.0:
            src = 0.0                      # PyTorch clamps source index to >= 0
        i0 = min(int(math.floor(src)), in_size - 1)
        i1 = i0 + (1 if i0 < in_size - 1 else 0)
        l1 = src - i0
        W[o, i0] += 1.0 - l1
        W[o, i1] += l1
    return W


def _crop_resize_weights(full_size, crop_start, crop_size, out_size):
    """(out_size, full_size) matrix == crop [start, start+size) then bilinear resize."""
    Wfull = np.zeros((out_size, full_size), dtype=np.float32)
    Wfull[:, crop_start:crop_start + crop_size] = _bilinear_weight_matrix(
        crop_size, out_size)
    return Wfull


# ----------------------------------------------------------------------------
# Pallas kernel: B image planes per grid step, bilinear crop+resize as matmuls.
#   img_ref : (B, H, W)            full-resolution planes (crop is in weights)
#   wy_ref  : (out_h, H)           row (height) interpolation matrix
#   wxt_ref : (W, out_w)           col (width) interpolation matrix (transposed)
#   out_ref : (1, out_h, B*out_w)  lane-dense output slab
# ----------------------------------------------------------------------------
def _resize_kernel(img_ref, wy_ref, wxt_ref, out_ref):
    b, h, w = img_ref.shape
    out_w = wxt_ref.shape[1]

    # (1) Width resize as ONE big MXU matmul: M = B*H keeps the systolic array full.
    planes = img_ref[...].reshape(b * h, w)
    tmp = jnp.dot(planes, wxt_ref[...], preferred_element_type=jnp.float32)
    tmp = tmp.reshape(b, h, out_w).astype(wy_ref.dtype)

    # (2) Height resize per plane; assemble one wide (out_h, B*out_w) slab so the
    #     final store is lane-dense instead of B narrow masked stores.
    wy = wy_ref[...]
    cols = [jnp.dot(wy, tmp[p], preferred_element_type=jnp.float32)
            for p in range(b)]
    slab = cols[0] if b == 1 else jnp.concatenate(cols, axis=-1)
    out_ref[0] = slab.astype(out_ref.dtype)


def _choose_plane_batch(nc, h, w, out_h, out_w, in_itemsize, out_itemsize,
                        vmem_budget_bytes=8 << 20):
    """Largest divisor of nc whose per-step footprint fits the VMEM budget;
    prefer leaving >= 2 grid steps so both v7x TensorCores get work."""
    per_plane = (2 * h * w * in_itemsize              # double-buffered input block
                 + h * out_w * 4                      # f32 intermediate
                 + out_h * out_w * 4                  # per-plane f32 result
                 + 2 * out_h * out_w * out_itemsize)  # double-buffered output block
    cap = max(1, int(vmem_budget_bytes // max(per_plane, 1)))
    best = 1
    for b in range(1, nc + 1):
        if nc % b == 0 and b <= cap:
            best = b
    if nc // best < 2:                                # keep the grid >= 2 when possible
        for b in range(best - 1, 0, -1):
            if nc % b == 0 and nc // b >= 2:
                best = b
                break
    return best


@partial(jax.jit, static_argnames=("out_h", "out_w", "plane_batch", "out_dtype"))
def _crop_resize_call(img_flat, wy, wxt, *, out_h, out_w, plane_batch, out_dtype):
    nc, H, W = img_flat.shape
    g = nc // plane_batch
    slab = pl.pallas_call(
        _resize_kernel,
        out_shape=jax.ShapeDtypeStruct((g, out_h, plane_batch * out_w), out_dtype),
        grid=(g,),
        in_specs=[
            pl.BlockSpec((plane_batch, H, W), lambda i: (i, 0, 0)),
            pl.BlockSpec((out_h, H), lambda i: (0, 0)),
            pl.BlockSpec((W, out_w), lambda i: (0, 0)),
        ],
        out_specs=pl.BlockSpec((1, out_h, plane_batch * out_w), lambda i: (i, 0, 0)),
        compiler_params=pltpu.CompilerParams(
            dimension_semantics=("parallel",)),
    )(img_flat, wy, wxt)
    # Un-interleave the lane-dense slab back to (NC, out_h, out_w): layout plumbing.
    out = slab.reshape(g, out_h, plane_batch, out_w).transpose(0, 2, 1, 3)
    return out.reshape(nc, out_h, out_w)


# ----------------------------------------------------------------------------
# Module-equivalent wrapper
# ----------------------------------------------------------------------------
class RandomResizedCropPallas:
    def __init__(self, size, scale=(0.08, 1.0), ratio=(3.0 / 4.0, 4.0 / 3.0),
                 compute_dtype=jnp.float32):
        if isinstance(size, (int, float)):
            size = (int(size), int(size))
        self.size = tuple(size)
        self.scale = scale
        self.ratio = ratio
        # Set compute_dtype=jnp.bfloat16 on v6e/v7x to halve VMEM/HBM bytes;
        # accumulation stays f32 inside the kernel.
        self.compute_dtype = compute_dtype
        # TODO(synk): interpolation is fixed to bilinear (Image.BILINEAR default);
        # nearest/bicubic modes are not implemented.

    def __call__(self, img, rng):
        # img: (N, C, H, W) float
        n, c, H, W = img.shape
        i, j, h, w = get_params(img.shape, self.scale, self.ratio, rng)
        out_h, out_w = self.size

        # Fold the crop window into the interpolation matrices -> the Pallas
        # kernel's shapes never change across calls (no recompilation).
        wy = jnp.asarray(_crop_resize_weights(H, i, h, out_h),
                         dtype=self.compute_dtype)            # (out_h, H)
        wxt = jnp.asarray(_crop_resize_weights(W, j, w, out_w).T,
                          dtype=self.compute_dtype)           # (W, out_w)

        nc = n * c
        img_flat = img.reshape(nc, H, W).astype(self.compute_dtype)  # free reshape
        out_dtype = np.dtype(img.dtype)
        plane_batch = _choose_plane_batch(
            nc, H, W, out_h, out_w,
            np.dtype(self.compute_dtype).itemsize, out_dtype.itemsize)

        out_flat = _crop_resize_call(
            img_flat, wy, wxt,
            out_h=out_h, out_w=out_w, plane_batch=plane_batch, out_dtype=out_dtype)
        return out_flat.reshape(n, c, out_h, out_w), (i, j, h, w)


if __name__ == "__main__":
    key = jax.random.PRNGKey(0)
    x = jax.random.normal(key, (2, 4, 16, 16), dtype=jnp.float32)
    n, c, H, W = x.shape

    module = RandomResizedCropPallas(size=(8, 8))
    rng = np.random.default_rng(0)  # deterministic crop params

    # Two calls with different random crop geometries: the kernel is
    # shape-stable, so the second call reuses the same compiled pallas_call.
    for _ in range(2):
        out, (i, j, h, w) = module(x, rng)
        out = jax.block_until_ready(out)
        assert out.shape == (n, c, 8, 8), out.shape

        # Reference: crop then PyTorch-style separable bilinear resize in plain JAX.
        crop = x[:, :, i:i + h, j:j + w].reshape(n * c, h, w)
        wy_c = jnp.asarray(_bilinear_weight_matrix(h, 8))
        wx_c = jnp.asarray(_bilinear_weight_matrix(w, 8))
        ref = jnp.einsum("oh,phw,qw->poq", wy_c, crop, wx_c).reshape(out.shape)
        np.testing.assert_allclose(np.asarray(out), np.asarray(ref),
                                   rtol=1e-5, atol=1e-5)

    print("KERNEL_OK")
</pallas_src>

<mosaic_0001>
module attributes {stable_mosaic.version = 11 : i64} {
  func.func @_resize_kernel(%arg0: i32, %arg1: memref<4x16x16xf32, #tpu.memory_space<vmem>>, %arg2: memref<8x16xf32, #tpu.memory_space<vmem>>, %arg3: memref<16x8xf32, #tpu.memory_space<vmem>>, %arg4: memref<1x8x32xf32, #tpu.memory_space<vmem>>) attributes {dimension_semantics = [#tpu.dimension_semantics<parallel>], iteration_bounds = array<i64: 2>, scalar_prefetch = 0 : i64, scratch_operands = 0 : i64, tpu.core_type = #tpu.core_type<tc>, window_params = [{transform_indices = @transform_0, window_bounds = array<i64: 4, 16, 16>}, {pipeline_mode = #tpu.pipeline_mode<synchronous>, transform_indices = @transform_1, window_bounds = array<i64: 8, 16>}, {pipeline_mode = #tpu.pipeline_mode<synchronous>, transform_indices = @transform_2, window_bounds = array<i64: 16, 8>}, {transform_indices = @transform_3, window_bounds = array<i64: 1, 8, 32>}]} {
    %c0 = arith.constant 0 : index
    %c0_0 = arith.constant 0 : index
    %c0_1 = arith.constant 0 : index
    %0 = vector.load %arg1[%c0, %c0_0, %c0_1] : memref<4x16x16xf32, #tpu.memory_space<vmem>>, vector<4x16x16xf32>
    %1 = vector.shape_cast %0 : vector<4x16x16xf32> to vector<64x16xf32>
    %c0_2 = arith.constant 0 : index
    %c0_3 = arith.constant 0 : index
    %2 = vector.load %arg3[%c0_2, %c0_3] : memref<16x8xf32, #tpu.memory_space<vmem>>, vector<16x8xf32>
    %cst = arith.constant dense<0.000000e+00> : vector<64x8xf32>
    %3 = tpu.matmul %1, %2, %cst {dimension_numbers = #tpu.dot_dimension_numbers<[1], [0], [0], [1], [0, 0, 1, 1], [], []>} : vector<64x16xf32>, vector<16x8xf32>, vector<64x8xf32> -> vector<64x8xf32>
    %4 = vector.shape_cast %3 : vector<64x8xf32> to vector<4x16x8xf32>
    %c0_4 = arith.constant 0 : index
    %c0_5 = arith.constant 0 : index
    %5 = vector.load %arg2[%c0_4, %c0_5] : memref<8x16xf32, #tpu.memory_space<vmem>>, vector<8x16xf32>
    %6 = vector.extract_strided_slice %4 {offsets = [0, 0, 0], sizes = [1, 16, 8], strides = [1, 1, 1]} : vector<4x16x8xf32> to vector<1x16x8xf32>
    %7 = vector.shape_cast %6 : vector<1x16x8xf32> to vector<16x8xf32>
    %cst_6 = arith.constant dense<0.000000e+00> : vector<8x8xf32>
    %8 = tpu.matmul %5, %7, %cst_6 {dimension_numbers = #tpu.dot_dimension_numbers<[1], [0], [0], [1], [0, 0, 1, 1], [], []>} : vector<8x16xf32>, vector<16x8xf32>, vector<8x8xf32> -> vector<8x8xf32>
    %9 = vector.extract_strided_slice %4 {offsets = [1, 0, 0], sizes = [1, 16, 8], strides = [1, 1, 1]} : vector<4x16x8xf32> to vector<1x16x8xf32>
    %10 = vector.shape_cast %9 : vector<1x16x8xf32> to vector<16x8xf32>
    %cst_7 = arith.constant dense<0.000000e+00> : vector<8x8xf32>
    %11 = tpu.matmul %5, %10, %cst_7 {dimension_numbers = #tpu.dot_dimension_numbers<[1], [0], [0], [1], [0, 0, 1, 1], [], []>} : vector<8x16xf32>, vector<16x8xf32>, vector<8x8xf32> -> vector<8x8xf32>
    %12 = vector.extract_strided_slice %4 {offsets = [2, 0, 0], sizes = [1, 16, 8], strides = [1, 1, 1]} : vector<4x16x8xf32> to vector<1x16x8xf32>
    %13 = vector.shape_cast %12 : vector<1x16x8xf32> to vector<16x8xf32>
    %cst_8 = arith.constant dense<0.000000e+00> : vector<8x8xf32>
    %14 = tpu.matmul %5, %13, %cst_8 {dimension_numbers = #tpu.dot_dimension_numbers<[1], [0], [0], [1], [0, 0, 1, 1], [], []>} : vector<8x16xf32>, vector<16x8xf32>, vector<8x8xf32> -> vector<8x8xf32>
    %15 = vector.extract_strided_slice %4 {offsets = [3, 0, 0], sizes = [1, 16, 8], strides = [1, 1, 1]} : vector<4x16x8xf32> to vector<1x16x8xf32>
    %16 = vector.shape_cast %15 : vector<1x16x8xf32> to vector<16x8xf32>
    %cst_9 = arith.constant dense<0.000000e+00> : vector<8x8xf32>
    %17 = tpu.matmul %5, %16, %cst_9 {dimension_numbers = #tpu.dot_dimension_numbers<[1], [0], [0], [1], [0, 0, 1, 1], [], []>} : vector<8x16xf32>, vector<16x8xf32>, vector<8x8xf32> -> vector<8x8xf32>
    %18 = tpu.concatenate %8, %11, %14, %17 in 1 : vector<8x8xf32>, vector<8x8xf32>, vector<8x8xf32>, vector<8x8xf32> -> vector<8x32xf32>
    %c0_10 = arith.constant 0 : index
    %c0_11 = arith.constant 0 : index
    %c0_12 = arith.constant 0 : index
    %19 = vector.load %arg4[%c0_10, %c0_11, %c0_12] : memref<1x8x32xf32, #tpu.memory_space<vmem>>, vector<1x8x32xf32>
    %20 = vector.shape_cast %19 : vector<1x8x32xf32> to vector<8x32xf32>
    %21 = vector.shape_cast %18 : vector<8x32xf32> to vector<1x8x32xf32>
    tpu.vector_store %arg4[%c0_10, %c0_11, %c0_12], %21 {strides = array<i32>} : memref<1x8x32xf32, #tpu.memory_space<vmem>>, vector<1x8x32xf32>,
    return
  }
  func.func @transform_0(%arg0: i32) -> (i32, i32, i32) {
    %c0_i32 = arith.constant 0 : i32
    %c0_i32_0 = arith.constant 0 : i32
    %c0_i32_1 = arith.constant 0 : i32
    return %arg0, %c0_i32, %c0_i32_0 : i32, i32, i32
  }
  func.func @transform_1(%arg0: i32) -> (i32, i32) {
    %c0_i32 = arith.constant 0 : i32
    %c0_i32_0 = arith.constant 0 : i32
    %c0_i32_1 = arith.constant 0 : i32
    return %c0_i32, %c0_i32_0 : i32, i32
  }
  func.func @transform_2(%arg0: i32) -> (i32, i32) {
    %c0_i32 = arith.constant 0 : i32
    %c0_i32_0 = arith.constant 0 : i32
    %c0_i32_1 = arith.constant 0 : i32
    return %c0_i32, %c0_i32_0 : i32, i32
  }
  func.func @transform_3(%arg0: i32) -> (i32, i32, i32) {
    %c0_i32 = arith.constant 0 : i32
    %c0_i32_0 = arith.constant 0 : i32
    %c0_i32_1 = arith.constant 0 : i32
    return %arg0, %c0_i32, %c0_i32_0 : i32, i32, i32
  }
}

</mosaic_0001>

<llo_original>
// kernel: _crop_resize_call.1
$region0: #{_crop_resize_call.1}
  #allocation0 [shape = 'u32[]', space=smem, size = 0x4, offset = 0x4, fixed_abs, tag = 'smem constant byte address 0x4 - core index']
  #allocation1 [shape = 'u32[144,128]{1,0:T(1,128)}', space=vmem, size = 0x12000, scoped, tag = 'internal scratch']
  %s0 = inlined_call_operand.hbm [shape: f32[8,16,16], index: 0, kind: input, shape index: {}]
  %s1 = inlined_call_operand.vmem [shape: f32[8,16], index: 1, kind: input, shape index: {}]
  %s2 = inlined_call_operand.vmem [shape: f32[16,8], index: 2, kind: input, shape index: {}]
  %s3 = inlined_call_operand.vmem [shape: f32[2,8,32], index: 3, kind: output, shape index: {}]
  %s4 = sld [smem:[#allocation0]]
  $region49: #{_crop_resize_call.1} parent=0
    _
  %s6 = ssub.s32 1, %s4
  %s7 = scalar_select 0, %s6, %s4
  $region1: #{_crop_resize_call.1} parent=0
    #allocation2 [shape = 'u8[65536]{0}', space=vmem, size = 0x10000, scoped, tag = 'input window, operand 0']
    #allocation3 [shape = 's32[2]{0}', space=sflag, size = 0x8, scoped, tag = 'scoped memory for _crop_resize_call.1']
    %8 = vsyncpa [#allocation3], 0
    %s9 = scalar_lea.sflag [#allocation3], 1
    %10 = vsyncpa %s9, 0
    loop: start=0, step=1, limit=4
    $region2: #{_crop_resize_call.1} parent=1 // loop_pre_header
      _
    $region3: #{_crop_resize_call.1} parent=1 // loop_header
      %s12 = sphi 0, %s16
      %p13 = scmp.ge.s32.totalorder %s12, 4
      %s22 = sphi 0, %s24
      %s25 = sphi 0, %s22
      %s26 = sphi 0, %s25
      %s42 = sphi 0, %s26
      %s46 = sphi 0, %s46
      %s48 = sphi 0, %s46
      %s49 = sphi 0, %s48
      %s63 = sphi 0, %s49
      %s67 = sphi 0, %s67
      %s69 = sphi 0, %s67
      %s70 = sphi 0, %s69
      %s84 = sphi 0, %s70
      %s90 = sphi 0, %s92
      %s93 = sphi 0, %s90
      %s94 = sphi 0, %s93
      %s110 = sphi 0, %s94
    $region4: #{_crop_resize_call.1} parent=1 // loop_header_branch
      %15 = sbr.rel (%p13) target = $region8
    $region5: #{_crop_resize_call.1} parent=1 // loop_body
      %s17 = ssub.s32 %s12, 1
      %s18 = ssub.s32 %s12, 2
      %s19 = sadd.s32 %s12, 1
      %s20 = ssub.s32 %s12, %s19
      %p21 = scmp.eq.s32.totalorder %s20, 0
      %s23 = sadd.s32 %s22, 1
      %s24 = scalar_select %p21, %s22, %s23
      %p27 = pneg %p21
      %p28 = scmp.eq.s32.totalorder %s12, 1
      %p29 = por %p27, %p28
      %p30 = scmp.ne.s32.totalorder %s22, %s25
      %p31 = scmp.eq.s32.totalorder %s12, 0
      %p32 = por %p30, %p31
      %p33 = scmp.ne.s32.totalorder %s22, %s25
      %p34 = scmp.eq.s32.totalorder %s17, 1
      %p35 = por %p33, %p34
      %p36 = scmp.ne.s32.totalorder %s25, %s26
      %p37 = scmp.eq.s32.totalorder %s17, 0
      %p38 = por %p36, %p37
      %p39 = scmp.ne.s32.totalorder %s25, %s26
      %p40 = scmp.eq.s32.totalorder %s18, 1
      %p41 = por %p39, %p40
      %p43 = scmp.ne.s32.totalorder %s26, %s42
      %p44 = scmp.eq.s32.totalorder %s18, 0
      %p45 = por %p43, %p44
      %s47 = sadd.s32 %s46, 1
      %p50 = scmp.eq.s32.totalorder %s12, 1
      %p51 = scmp.ne.s32.totalorder %s46, %s48
      %p52 = scmp.eq.s32.totalorder %s12, 0
      %p53 = por %p51, %p52
      %p54 = scmp.ne.s32.totalorder %s46, %s48
      %p55 = scmp.eq.s32.totalorder %s17, 1
      %p56 = por %p54, %p55
      %p57 = scmp.ne.s32.totalorder %s48, %s49
      %p58 = scmp.eq.s32.totalorder %s17, 0
      %p59 = por %p57, %p58
      %p60 = scmp.ne.s32.totalorder %s48, %s49
      %p61 = scmp.eq.s32.totalorder %s18, 1
      %p62 = por %p60, %p61
      %p64 = scmp.ne.s32.totalorder %s49, %s63
      %p65 = scmp.eq.s32.totalorder %s18, 0
      %p66 = por %p64, %p65
      %s68 = sadd.s32 %s67, 1
      %p71 = scmp.eq.s32.totalorder %s12, 1
      %p72 = scmp.ne.s32.totalorder %s67, %s69
      %p73 = scmp.eq.s32.totalorder %s12, 0
      %p74 = por %p72, %p73
      %p75 = scmp.ne.s32.totalorder %s67, %s69
      %p76 = scmp.eq.s32.totalorder %s17, 1
      %p77 = por %p75, %p76
      %p78 = scmp.ne.s32.totalorder %s69, %s70
      %p79 = scmp.eq.s32.totalorder %s17, 0
      %p80 = por %p78, %p79
      %p81 = scmp.ne.s32.totalorder %s69, %s70
      %p82 = scmp.eq.s32.totalorder %s18, 1
      %p83 = por %p81, %p82
      %p85 = scmp.ne.s32.totalorder %s70, %s84
      %p86 = scmp.eq.s32.totalorder %s18, 0
      %p87 = por %p85, %p86
      %s88 = ssub.s32 %s12, %s19
      %p89 = scmp.eq.s32.totalorder %s88, 0
      %s91 = sadd.s32 %s90, 1
      %s92 = scalar_select %p89, %s90, %s91
      %p95 = pneg %p89
      %p96 = scmp.eq.s32.totalorder %s12, 1
      %p97 = por %p95, %p96
      %p98 = scmp.ne.s32.totalorder %s90, %s93
      %p99 = scmp.eq.s32.totalorder %s12, 0
      %p100 = por %p98, %p99
      %p101 = scmp.ne.s32.totalorder %s90, %s93
      %p102 = scmp.eq.s32.totalorder %s17, 1
      %p103 = por %p101, %p102
      %p104 = scmp.ne.s32.totalorder %s93, %s94
      %p105 = scmp.eq.s32.totalorder %s17, 0
      %p106 = por %p104, %p105
      %p107 = scmp.ne.s32.totalorder %s93, %s94
      %p108 = scmp.eq.s32.totalorder %s18, 1
      %p109 = por %p107, %p108
      %p111 = scmp.ne.s32.totalorder %s94, %s110
      %p112 = scmp.eq.s32.totalorder %s18, 0
      %p113 = por %p111, %p112
      %p114 = scmp.le.s32.totalorder 1, %s12
      %p115 = scmp.lt.s32.totalorder %s12, 3
      %p116 = pnand %p114, %p115
      %p117 = pneg %p116
      // Predicated region
      $region9: #{_crop_resize_call.1} parent=5 // pred_check
        _
      $region10: #{_crop_resize_call.1} parent=5 // pred_check_branch
        %119 = sbr.rel (%p116) target = $region12
      $region11: #{_crop_resize_call.1} parent=5 // pred_region
        %s120 = ssub.s32 %s12, 1
        // Predicated region
        $region13: #{_crop_resize_call.1} parent=11 // pred_check
          %p121 = pneg %p59
        $region14: #{_crop_resize_call.1} parent=11 // pred_check_branch
          %123 = sbr.rel (%p121) target = $region16
        $region15: #{_crop_resize_call.1} parent=11 // pred_region
          _
        $region16: #{_crop_resize_call.1} parent=11 // pred_fallthru
          _
        // Predicated region
        $region17: #{_crop_resize_call.1} parent=11 // pred_check
          %p124 = pneg %p80
        $region18: #{_crop_resize_call.1} parent=11 // pred_check_branch
          %126 = sbr.rel (%p124) target = $region20
        $region19: #{_crop_resize_call.1} parent=11 // pred_region
          _
        $region20: #{_crop_resize_call.1} parent=11 // pred_fallthru
          _
      $region12: #{_crop_resize_call.1} parent=5 // pred_fallthru
        _
      %p127 = scmp.lt.s32.totalorder %s12, 2
      // Predicated region
      $region21: #{_crop_resize_call.1} parent=5 // pred_check
        %p128 = pneg %p127
      $region22: #{_crop_resize_call.1} parent=5 // pred_check_branch
        %130 = sbr.rel (%p128) target = $region24
      $region23: #{_crop_resize_call.1} parent=5 // pred_region
        // Predicated region
        $region25: #{_crop_resize_call.1} parent=23 // pred_check
          %p131 = pneg %p32
        $region26: #{_crop_resize_call.1} parent=23 // pred_check_branch
          %133 = sbr.rel (%p131) target = $region28
        $region27: #{_crop_resize_call.1} parent=23 // pred_region
          %s134 = sand.u32 %s22, 1
          %s135 = scalar_lea.sflag [#allocation3], %s134
          %s136 = sand.u32 %s22, 1
          %s137 = smul.addr %s136, 64
          %s138 = scalar_lea.vmem [#allocation2], %s137
          %s139 = smul.u32 4, %s12
          %s141 = ssub.s32 1024, 1024
          %142 = vsyncadd %s135, %s141
          %s143 = smul.addr %s139, 2
          %s144 = smul.addr %s143, 128
          %s145 = scalar_lea.hbm %s0, %s144
          %s146 = sshll.u32 %s138, 4
          %s147 = int_to_ptr.vmem [resolvable:$true] %s146
          %152 = dma.hbm_to_vmem [thread:$0]  %s145, 1024, %s147, %s135, 128, 128, 8
        $region28: #{_crop_resize_call.1} parent=23 // pred_fallthru
          _
      $region24: #{_crop_resize_call.1} parent=5 // pred_fallthru
        _
      %p153 = scmp.le.s32.totalorder 1, %s12
      %p154 = scmp.lt.s32.totalorder %s12, 3
      %p155 = pnand %p153, %p154
      %p156 = pneg %p155
      // Predicated region
      $region29: #{_crop_resize_call.1} parent=5 // pred_check
        _
      $region30: #{_crop_resize_call.1} parent=5 // pred_check_branch
        %158 = sbr.rel (%p155) target = $region32
      $region31: #{_crop_resize_call.1} parent=5 // pred_region
        %s159 = ssub.s32 %s12, 1
        %s160 = sand.u32 %s25, 1
        %s161 = scalar_lea.sflag [#allocation3], %s160
        %s162 = sand.u32 %s25, 1
        %s163 = smul.addr %s162, 64
        %s164 = scalar_lea.vmem [#allocation2], %s163
        // Predicated region
        $region33: #{_crop_resize_call.1} parent=31 // pred_check
          %p165 = pneg %p38
        $region34: #{_crop_resize_call.1} parent=31 // pred_check_branch
          %167 = sbr.rel (%p165) target = $region36
        $region35: #{_crop_resize_call.1} parent=31 // pred_region
          %168 = dma.done %s161, 1024
        $region36: #{_crop_resize_call.1} parent=31 // pred_fallthru
          _
        %s169 = sand.u32 %s25, 1
        %s170 = scalar_lea.sflag [#allocation3], %s169
        %s171 = sand.u32 %s25, 1
        %s172 = smul.addr %s171, 64
        %s173 = scalar_lea.vmem [#allocation2], %s172
        %p174 = pneg %p38
        %p175 = pneg %p35
        %p176 = pneg %p59
        %p177 = pneg %p56
        %p178 = pneg %p80
        %p179 = pneg %p77
        %p180 = pneg %p106
        %p181 = pneg %p103
        %p182 = scmp.lt.s32.totalorder %s17, 1
        %s183 = scalar_select %p182, %s17, 1
        %s184 = smul.addr %s183, 8
        %s185 = scalar_lea.vmem %s3, %s184
        %s186 = smul.u32 4, %s17
        %p187 = scmp.lt.s32.totalorder %s17, 1
        %s188 = scalar_select %p187, %s17, 1
        %s189 = smul.addr %s188, 8
        %s190 = scalar_lea.vmem %s3, %s189
        %v191 = vld [vmem:[%s164] sm:$0xff]
        %v192 = vld [vmem:[%s164 + $0x8] sm:$0xff]
        %v193 = vld [vmem:[%s164 + $0x10] sm:$0xff]
        %v194 = vld [vmem:[%s164 + $0x18] sm:$0xff]
        %v195 = vld [vmem:[%s164 + $0x20] sm:$0xff]
        %v196 = vld [vmem:[%s164 + $0x28] sm:$0xff]
        %v197 = vld [vmem:[%s164 + $0x30] sm:$0xff]
        %v198 = vld [vmem:[%s164 + $0x38] sm:$0xff]
        %v199 = vld [vmem:[%s2] sm:$0xff]
        %v200 = vld [vmem:[%s2 + $0x8] sm:$0xff]
        %vm201 = vcmask 130048
        %v203 = vsel %vm201, %v191, 0
        %v206 = vsel %vm201, %v192, 0
        %v209 = vsel %vm201, %v193, 0
        %v212 = vsel %vm201, %v194, 0
        %v215 = vsel %vm201, %v195, 0
        %v218 = vsel %vm201, %v196, 0
        %v221 = vsel %vm201, %v197, 0
        %v224 = vsel %vm201, %v198, 0
        %226 = vmatprep.subr.mxu0 0.0
        %227 = vmatpush1.msra.mxu0 %v199
        %228 = vmatprep.subr.mxu0 0.0
        %229 = vmatpush1.msra.mxu0 %v200
        %230 = vmatprep.subr.mxu0 0.0
        %231 = vmatpush1.msra.mxu0 0.0
        %232 = vmatprep.subr.mxu0 0.0
        %233 = vmatpush1.msra.mxu0 0.0
        %234 = vmatprep.subr.mxu0 0.0
        %235 = vmatpush1.msra.mxu0 0.0
        %236 = vmatprep.subr.mxu0 0.0
        %237 = vmatpush1.msra.mxu0 0.0
        %238 = vmatprep.subr.mxu0 0.0
        %239 = vmatpush1.msra.mxu0 0.0
        %240 = vmatprep.subr.mxu0 0.0
        %241 = vmatpush1.msra.mxu0 0.0
        %242 = vmatprep.subr.mxu0 0.0
        %243 = vmatpush1.msra.mxu0 0.0
        %244 = vmatprep.subr.mxu0 0.0
        %245 = vmatpush1.msra.mxu0 0.0
        %246 = vmatprep.subr.mxu0 0.0
        %247 = vmatpush1.msra.mxu0 0.0
        %248 = vmatprep.subr.mxu0 0.0
        %249 = vmatpush1.msra.mxu0 0.0
        %250 = vmatprep.subr.mxu0 0.0
        %251 = vmatpush1.msra.mxu0 0.0
        %252 = vmatprep.subr.mxu0 0.0
        %253 = vmatpush1.msra.mxu0 0.0
        %254 = vmatprep.subr.mxu0 0.0
        %255 = vmatpush1.msra.mxu0 0.0
        %256 = vmatprep.subr.mxu0 0.0
        %257 = vmatpush1.msra.mxu0 0.0
        %258 = vmatprep.subr.mxu0 0.0
        %259 = vmatpush1.msra.mxu0 0.0
        %260 = vmatprep.subr.mxu0 0.0
        %261 = vmatpush1.msra.mxu0 0.0
        %262 = vmatprep.subr.mxu0 0.0
        %263 = vmatpush1.msra.mxu0 0.0
        %264 = vmatprep.subr.mxu0 0.0
        %265 = vmatpush1.msra.mxu0 0.0
        %266 = vmatprep.subr.mxu0 0.0
        %267 = vmatpush1.msra.mxu0 0.0
        %268 = vmatprep.subr.mxu0 0.0
        %269 = vmatpush1.msra.mxu0 0.0
        %270 = vmatprep.subr.mxu0 0.0
        %271 = vmatpush1.msra.mxu0 0.0
        %272 = vmatprep.subr.mxu0 0.0
        %273 = vmatpush1.msra.mxu0 0.0
        %274 = vmatprep.subr.mxu0 0.0
        %275 = vmatpush1.msra.mxu0 0.0
        %276 = vmatprep.subr.mxu0 0.0
        %277 = vmatpush1.msra.mxu0 0.0
        %278 = vmatprep.subr.mxu0 0.0
        %279 = vmatpush1.msra.mxu0 0.0
        %280 = vmatprep.subr.mxu0 0.0
        %281 = vmatpush1.msra.mxu0 0.0
        %282 = vmatprep.subr.mxu0 0.0
        %283 = vmatpush1.msra.mxu0 0.0
        %284 = vmatprep.subr.mxu0 0.0
        %285 = vmatpush1.msra.mxu0 0.0
        %286 = vmatprep.subr.mxu0 0.0
        %287 = vmatpush1.msra.mxu0 0.0
        %288 = vmatprep.subr.mxu0 0.0
        %289 = vmatpush1.msra.mxu0 0.0
        %290 = vmatprep.mubr.f32.mxu0 0.0
        %291 = vmatmul.mubr.f32.gmra.mrb[0].mxu0 %v203
        %v292 = vpop.f32.mrb[0].mxu0
        %v293 = vadd.f32 0.0, %v292
        %v294 = vpop.f32.mrb[0].mxu0
        %295 = vmatprep.mubr.f32.mxu0 0.0
        %296 = vmatmul.mubr.f32.gmra.mrb[0].mxu0 %v206
        %v297 = vpop.f32.mrb[0].mxu0
        %v298 = vadd.f32 0.0, %v297
        %v299 = vpop.f32.mrb[0].mxu0
        %300 = vmatprep.mubr.f32.mxu0 0.0
        %301 = vmatmul.mubr.f32.gmra.mrb[0].mxu0 %v209
        %v302 = vpop.f32.mrb[0].mxu0
        %v303 = vadd.f32 0.0, %v302
        %v304 = vpop.f32.mrb[0].mxu0
        %305 = vmatprep.mubr.f32.mxu0 0.0
        %306 = vmatmul.mubr.f32.gmra.mrb[0].mxu0 %v212
        %v307 = vpop.f32.mrb[0].mxu0
        %v308 = vadd.f32 0.0, %v307
        %v309 = vpop.f32.mrb[0].mxu0
        %310 = vmatprep.mubr.f32.mxu0 0.0
        %311 = vmatmul.mubr.f32.gmra.mrb[0].mxu0 %v215
        %v312 = vpop.f32.mrb[0].mxu0
        %v313 = vadd.f32 0.0, %v312
        %v314 = vpop.f32.mrb[0].mxu0
        %315 = vmatprep.mubr.f32.mxu0 0.0
        %316 = vmatmul.mubr.f32.gmra.mrb[0].mxu0 %v218
        %v317 = vpop.f32.mrb[0].mxu0
        %v318 = vadd.f32 0.0, %v317
        %v319 = vpop.f32.mrb[0].mxu0
        %320 = vmatprep.mubr.f32.mxu0 0.0
        %321 = vmatmul.mubr.f32.gmra.mrb[0].mxu0 %v221
        %v322 = vpop.f32.mrb[0].mxu0
        %v323 = vadd.f32 0.0, %v322
        %v324 = vpop.f32.mrb[0].mxu0
        %325 = vmatprep.mubr.f32.mxu0 0.0
        %326 = vmatmul.mubr.f32.gmra.mrb[0].mxu0 %v224
        %v327 = vpop.f32.mrb[0].mxu0
        %v328 = vadd.f32 0.0, %v327
        %v329 = vpop.f32.mrb[0].mxu0
        %330 = vdwg.mxu0
        %v331 = vld [vmem:[%s1] sm:$0xff]
        %v333 = vsel %vm201, %v331, 0
        %335 = vmatprep.subr.mxu0 0.0
        %336 = vmatpush1.msra.mxu0 %v293
        %337 = vmatprep.subr.mxu0 0.0
        %338 = vmatpush1.msra.mxu0 %v298
        %339 = vmatprep.subr.mxu0 0.0
        %340 = vmatpush1.msra.mxu0 0.0
        %341 = vmatprep.subr.mxu0 0.0
        %342 = vmatpush1.msra.mxu0 0.0
        %343 = vmatprep.subr.mxu0 0.0
        %344 = vmatpush1.msra.mxu0 0.0
        %345 = vmatprep.subr.mxu0 0.0
        %346 = vmatpush1.msra.mxu0 0.0
        %347 = vmatprep.subr.mxu0 0.0
        %348 = vmatpush1.msra.mxu0 0.0
        %349 = vmatprep.subr.mxu0 0.0
        %350 = vmatpush1.msra.mxu0 0.0
        %351 = vmatprep.subr.mxu0 0.0
        %352 = vmatpush1.msra.mxu0 0.0
        %353 = vmatprep.subr.mxu0 0.0
        %354 = vmatpush1.msra.mxu0 0.0
        %355 = vmatprep.subr.mxu0 0.0
        %356 = vmatpush1.msra.mxu0 0.0
        %357 = vmatprep.subr.mxu0 0.0
        %358 = vmatpush1.msra.mxu0 0.0
        %359 = vmatprep.subr.mxu0 0.0
        %360 = vmatpush1.msra.mxu0 0.0
        %361 = vmatprep.subr.mxu0 0.0
        %362 = vmatpush1.msra.mxu0 0.0
        %363 = vmatprep.subr.mxu0 0.0
        %364 = vmatpush1.msra.mxu0 0.0
        %365 = vmatprep.subr.mxu0 0.0
        %366 = vmatpush1.msra.mxu0 0.0
        %367 = vmatprep.subr.mxu0 0.0
        %368 = vmatpush1.msra.mxu0 0.0
        %369 = vmatprep.subr.mxu0 0.0
        %370 = vmatpush1.msra.mxu0 0.0
        %371 = vmatprep.subr.mxu0 0.0
        %372 = vmatpush1.msra.mxu0 0.0
        %373 = vmatprep.subr.mxu0 0.0
        %374 = vmatpush1.msra.mxu0 0.0
        %375 = vmatprep.subr.mxu0 0.0
        %376 = vmatpush1.msra.mxu0 0.0
        %377 = vmatprep.subr.mxu0 0.0
        %378 = vmatpush1.msra.mxu0 0.0
        %379 = vmatprep.subr.mxu0 0.0
        %380 = vmatpush1.msra.mxu0 0.0
        %381 = vmatprep.subr.mxu0 0.0
        %382 = vmatpush1.msra.mxu0 0.0
        %383 = vmatprep.subr.mxu0 0.0
        %384 = vmatpush1.msra.mxu0 0.0
        %385 = vmatprep.subr.mxu0 0.0
        %386 = vmatpush1.msra.mxu0 0.0
        %387 = vmatprep.subr.mxu0 0.0
        %388 = vmatpush1.msra.mxu0 0.0
        %389 = vmatprep.subr.mxu0 0.0
        %390 = vmatpush1.msra.mxu0 0.0
        %391 = vmatprep.subr.mxu0 0.0
        %392 = vmatpush1.msra.mxu0 0.0
        %393 = vmatprep.subr.mxu0 0.0
        %394 = vmatpush1.msra.mxu0 0.0
        %395 = vmatprep.subr.mxu0 0.0
        %396 = vmatpush1.msra.mxu0 0.0
        %397 = vmatprep.subr.mxu0 0.0
        %398 = vmatpush1.msra.mxu0 0.0
        %399 = vmatprep.mubr.f32.mxu0 0.0
        %400 = vmatmul.mubr.f32.gmra.mrb[0].mxu0 %v333
        %v401 = vpop.f32.mrb[0].mxu0
        %v402 = vadd.f32 0.0, %v401
        %v403 = vpop.f32.mrb[0].mxu0
        %404 = vdwg.mxu0
        %405 = vmatprep.subr.mxu0 0.0
        %406 = vmatpush1.msra.mxu0 %v303
        %407 = vmatprep.subr.mxu0 0.0
        %408 = vmatpush1.msra.mxu0 %v308
        %409 = vmatprep.subr.mxu0 0.0
        %410 = vmatpush1.msra.mxu0 0.0
        %411 = vmatprep.subr.mxu0 0.0
        %412 = vmatpush1.msra.mxu0 0.0
        %413 = vmatprep.subr.mxu0 0.0
        %414 = vmatpush1.msra.mxu0 0.0
        %415 = vmatprep.subr.mxu0 0.0
        %416 = vmatpush1.msra.mxu0 0.0
        %417 = vmatprep.subr.mxu0 0.0
        %418 = vmatpush1.msra.mxu0 0.0
        %419 = vmatprep.subr.mxu0 0.0
        %420 = vmatpush1.msra.mxu0 0.0
        %421 = vmatprep.subr.mxu0 0.0
        %422 = vmatpush1.msra.mxu0 0.0
        %423 = vmatprep.subr.mxu0 0.0
        %424 = vmatpush1.msra.mxu0 0.0
        %425 = vmatprep.subr.mxu0 0.0
        %426 = vmatpush1.msra.mxu0 0.0
        %427 = vmatprep.subr.mxu0 0.0
        %428 = vmatpush1.msra.mxu0 0.0
        %429 = vmatprep.subr.mxu0 0.0
        %430 = vmatpush1.msra.mxu0 0.0
        %431 = vmatprep.subr.mxu0 0.0
        %432 = vmatpush1.msra.mxu0 0.0
        %433 = vmatprep.subr.mxu0 0.0
        %434 = vmatpush1.msra.mxu0 0.0
        %435 = vmatprep.subr.mxu0 0.0
        %436 = vmatpush1.msra.mxu0 0.0
        %437 = vmatprep.subr.mxu0 0.0
        %438 = vmatpush1.msra.mxu0 0.0
        %439 = vmatprep.subr.mxu0 0.0
        %440 = vmatpush1.msra.mxu0 0.0
        %441 = vmatprep.subr.mxu0 0.0
        %442 = vmatpush1.msra.mxu0 0.0
        %443 = vmatprep.subr.mxu0 0.0
        %444 = vmatpush1.msra.mxu0 0.0
        %445 = vmatprep.subr.mxu0 0.0
        %446 = vmatpush1.msra.mxu0 0.0
        %447 = vmatprep.subr.mxu0 0.0
        %448 = vmatpush1.msra.mxu0 0.0
        %449 = vmatprep.subr.mxu0 0.0
        %450 = vmatpush1.msra.mxu0 0.0
        %451 = vmatprep.subr.mxu0 0.0
        %452 = vmatpush1.msra.mxu0 0.0
        %453 = vmatprep.subr.mxu0 0.0
        %454 = vmatpush1.msra.mxu0 0.0
        %455 = vmatprep.subr.mxu0 0.0
        %456 = vmatpush1.msra.mxu0 0.0
        %457 = vmatprep.subr.mxu0 0.0
        %458 = vmatpush1.msra.mxu0 0.0
        %459 = vmatprep.subr.mxu0 0.0
        %460 = vmatpush1.msra.mxu0 0.0
        %461 = vmatprep.subr.mxu0 0.0
        %462 = vmatpush1.msra.mxu0 0.0
        %463 = vmatprep.subr.mxu0 0.0
        %464 = vmatpush1.msra.mxu0 0.0
        %465 = vmatprep.subr.mxu0 0.0
        %466 = vmatpush1.msra.mxu0 0.0
        %467 = vmatprep.subr.mxu0 0.0
        %468 = vmatpush1.msra.mxu0 0.0
        %469 = vmatprep.mubr.f32.mxu0 0.0
        %470 = vmatmul.mubr.f32.gmra.mrb[0].mxu0 %v333
        %v471 = vpop.f32.mrb[0].mxu0
        %v472 = vadd.f32 0.0, %v471
        %v473 = vpop.f32.mrb[0].mxu0
        %474 = vdwg.mxu0
        %475 = vmatprep.subr.mxu0 0.0
        %476 = vmatpush1.msra.mxu0 %v313
        %477 = vmatprep.subr.mxu0 0.0
        %478 = vmatpush1.msra.mxu0 %v318
        %479 = vmatprep.subr.mxu0 0.0
        %480 = vmatpush1.msra.mxu0 0.0
        %481 = vmatprep.subr.mxu0 0.0
        %482 = vmatpush1.msra.mxu0 0.0
        %483 = vmatprep.subr.mxu0 0.0
        %484 = vmatpush1.msra.mxu0 0.0
        %485 = vmatprep.subr.mxu0 0.0
        %486 = vmatpush1.msra.mxu0 0.0
        %487 = vmatprep.subr.mxu0 0.0
        %488 = vmatpush1.msra.mxu0 0.0
        %489 = vmatprep.subr.mxu0 0.0
        %490 = vmatpush1.msra.mxu0 0.0
        %491 = vmatprep.subr.mxu0 0.0
        %492 = vmatpush1.msra.mxu0 0.0
        %493 = vmatprep.subr.mxu0 0.0
        %494 = vmatpush1.msra.mxu0 0.0
        %495 = vmatprep.subr.mxu0 0.0
        %496 = vmatpush1.msra.mxu0 0.0
        %497 = vmatprep.subr.mxu0 0.0
        %498 = vmatpush1.msra.mxu0 0.0
        %499 = vmatprep.subr.mxu0 0.0
        %500 = vmatpush1.msra.mxu0 0.0
        %501 = vmatprep.subr.mxu0 0.0
        %502 = vmatpush1.msra.mxu0 0.0
        %503 = vmatprep.subr.mxu0 0.0
        %504 = vmatpush1.msra.mxu0 0.0
        %505 = vmatprep.subr.mxu0 0.0
        %506 = vmatpush1.msra.mxu0 0.0
        %507 = vmatprep.subr.mxu0 0.0
        %508 = vmatpush1.msra.mxu0 0.0
        %509 = vmatprep.subr.mxu0 0.0
        %510 = vmatpush1.msra.mxu0 0.0
        %511 = vmatprep.subr.mxu0 0.0
        %512 = vmatpush1.msra.mxu0 0.0
        %513 = vmatprep.subr.mxu0 0.0
        %514 = vmatpush1.msra.mxu0 0.0
        %515 = vmatprep.subr.mxu0 0.0
        %516 = vmatpush1.msra.mxu0 0.0
        %517 = vmatprep.subr.mxu0 0.0
        %518 = vmatpush1.msra.mxu0 0.0
        %519 = vmatprep.subr.mxu0 0.0
        %520 = vmatpush1.msra.mxu0 0.0
        %521 = vmatprep.subr.mxu0 0.0
        %522 = vmatpush1.msra.mxu0 0.0
        %523 = vmatprep.subr.mxu0 0.0
        %524 = vmatpush1.msra.mxu0 0.0
        %525 = vmatprep.subr.mxu0 0.0
        %526 = vmatpush1.msra.mxu0 0.0
        %527 = vmatprep.subr.mxu0 0.0
        %528 = vmatpush1.msra.mxu0 0.0
        %529 = vmatprep.subr.mxu0 0.0
        %530 = vmatpush1.msra.mxu0 0.0
        %531 = vmatprep.subr.mxu0 0.0
        %532 = vmatpush1.msra.mxu0 0.0
        %533 = vmatprep.subr.mxu0 0.0
        %534 = vmatpush1.msra.mxu0 0.0
        %535 = vmatprep.subr.mxu0 0.0
        %536 = vmatpush1.msra.mxu0 0.0
        %537 = vmatprep.subr.mxu0 0.0
        %538 = vmatpush1.msra.mxu0 0.0
        %539 = vmatprep.mubr.f32.mxu0 0.0
        %540 = vmatmul.mubr.f32.gmra.mrb[0].mxu0 %v333
        %v541 = vpop.f32.mrb[0].mxu0
        %v542 = vadd.f32 0.0, %v541
        %v543 = vpop.f32.mrb[0].mxu0
        %544 = vdwg.mxu0
        %545 = vmatprep.subr.mxu0 0.0
        %546 = vmatpush1.msra.mxu0 %v323
        %547 = vmatprep.subr.mxu0 0.0
        %548 = vmatpush1.msra.mxu0 %v328
        %549 = vmatprep.subr.mxu0 0.0
        %550 = vmatpush1.msra.mxu0 0.0
        %551 = vmatprep.subr.mxu0 0.0
        %552 = vmatpush1.msra.mxu0 0.0
        %553 = vmatprep.subr.mxu0 0.0
        %554 = vmatpush1.msra.mxu0 0.0
        %555 = vmatprep.subr.mxu0 0.0
        %556 = vmatpush1.msra.mxu0 0.0
        %557 = vmatprep.subr.mxu0 0.0
        %558 = vmatpush1.msra.mxu0 0.0
        %559 = vmatprep.subr.mxu0 0.0
        %560 = vmatpush1.msra.mxu0 0.0
        %561 = vmatprep.subr.mxu0 0.0
        %562 = vmatpush1.msra.mxu0 0.0
        %563 = vmatprep.subr.mxu0 0.0
        %564 = vmatpush1.msra.mxu0 0.0
        %565 = vmatprep.subr.mxu0 0.0
        %566 = vmatpush1.msra.mxu0 0.0
        %567 = vmatprep.subr.mxu0 0.0
        %568 = vmatpush1.msra.mxu0 0.0
        %569 = vmatprep.subr.mxu0 0.0
        %570 = vmatpush1.msra.mxu0 0.0
        %571 = vmatprep.subr.mxu0 0.0
        %572 = vmatpush1.msra.mxu0 0.0
        %573 = vmatprep.subr.mxu0 0.0
        %574 = vmatpush1.msra.mxu0 0.0
        %575 = vmatprep.subr.mxu0 0.0
        %576 = vmatpush1.msra.mxu0 0.0
        %577 = vmatprep.subr.mxu0 0.0
        %578 = vmatpush1.msra.mxu0 0.0
        %579 = vmatprep.subr.mxu0 0.0
        %580 = vmatpush1.msra.mxu0 0.0
        %581 = vmatprep.subr.mxu0 0.0
        %582 = vmatpush1.msra.mxu0 0.0
        %583 = vmatprep.subr.mxu0 0.0
        %584 = vmatpush1.msra.mxu0 0.0
        %585 = vmatprep.subr.mxu0 0.0
        %586 = vmatpush1.msra.mxu0 0.0
        %587 = vmatprep.subr.mxu0 0.0
        %588 = vmatpush1.msra.mxu0 0.0
        %589 = vmatprep.subr.mxu0 0.0
        %590 = vmatpush1.msra.mxu0 0.0
        %591 = vmatprep.subr.mxu0 0.0
        %592 = vmatpush1.msra.mxu0 0.0
        %593 = vmatprep.subr.mxu0 0.0
        %594 = vmatpush1.msra.mxu0 0.0
        %595 = vmatprep.subr.mxu0 0.0
        %596 = vmatpush1.msra.mxu0 0.0
        %597 = vmatprep.subr.mxu0 0.0
        %598 = vmatpush1.msra.mxu0 0.0
        %599 = vmatprep.subr.mxu0 0.0
        %600 = vmatpush1.msra.mxu0 0.0
        %601 = vmatprep.subr.mxu0 0.0
        %602 = vmatpush1.msra.mxu0 0.0
        %603 = vmatprep.subr.mxu0 0.0
        %604 = vmatpush1.msra.mxu0 0.0
        %605 = vmatprep.subr.mxu0 0.0
        %606 = vmatpush1.msra.mxu0 0.0
        %607 = vmatprep.subr.mxu0 0.0
        %608 = vmatpush1.msra.mxu0 0.0
        %609 = vmatprep.mubr.f32.mxu0 0.0
        %610 = vmatmul.mubr.f32.gmra.mrb[0].mxu0 %v333
        %v611 = vpop.f32.mrb[0].mxu0
        %v612 = vadd.f32 0.0, %v611
        %v613 = vpop.f32.mrb[0].mxu0
        %614 = vdwg.mxu0
        %616 = vrot.lane.b32.xlu0 %v472, 8
        %v617 = vpop.permute.xlu0 %616
        %620 = vrot.lane.b32.xlu0 %v542, 16
        %v621 = vpop.permute.xlu0 %620
        %624 = vrot.lane.b32.xlu0 %v612, 24
        %v625 = vpop.permute.xlu0 %624
        %vm627 = vcmask 64512
        %v628 = vsel %vm627, %v402, %v617
        %v629 = vsel %vm201, %v628, %v621
        %vm630 = vcmask 195584
        %v631 = vsel %vm630, %v629, %v625
        %vm632 = vcmask 261120
        %633 = vst.msk [vmem:[%s190] sm:$0xff] %vm632, %v631
        %p634 = scmp.lt.s32.totalorder %s17, 1
        %s635 = scalar_select %p634, %s17, 1
        %s636 = smul.addr %s635, 8
        %s637 = scalar_lea.vmem %s3, %s636
        // Predicated region
        $region37: #{_crop_resize_call.1} parent=31 // pred_check
          %p638 = pneg %p103
        $region38: #{_crop_resize_call.1} parent=31 // pred_check_branch
          %640 = sbr.rel (%p638) target = $region40
        $region39: #{_crop_resize_call.1} parent=31 // pred_region
          _
        $region40: #{_crop_resize_call.1} parent=31 // pred_fallthru
          _
      $region32: #{_crop_resize_call.1} parent=5 // pred_fallthru
        _
      %p641 = scmp.le.s32.totalorder 2, %s12
      // Predicated region
      $region41: #{_crop_resize_call.1} parent=5 // pred_check
        %p642 = pneg %p641
      $region42: #{_crop_resize_call.1} parent=5 // pred_check_branch
        %644 = sbr.rel (%p642) target = $region44
      $region43: #{_crop_resize_call.1} parent=5 // pred_region
        %s645 = ssub.s32 %s12, 2
        // Predicated region
        $region45: #{_crop_resize_call.1} parent=43 // pred_check
          %p646 = pneg %p109
        $region46: #{_crop_resize_call.1} parent=43 // pred_check_branch
          %648 = sbr.rel (%p646) target = $region48
        $region47: #{_crop_resize_call.1} parent=43 // pred_region
          %p649 = scmp.lt.s32.totalorder %s18, 1
          %s650 = scalar_select %p649, %s18, 1
          %s651 = smul.addr %s650, 8
          %s652 = scalar_lea.vmem %s3, %s651
        $region48: #{_crop_resize_call.1} parent=43 // pred_fallthru
          _
      $region44: #{_crop_resize_call.1} parent=5 // pred_fallthru
        _
    $region6: #{_crop_resize_call.1} parent=1 // loop_footer
      %s16 = sadd.s32 1, %s12
    $region7: #{_crop_resize_call.1} parent=1 // loop_footer_branch
      %11 = sbr.rel target = $region3
    $region8: #{_crop_resize_call.1} parent=1 // loop_exit
      _
    %653 = vsyncpa [#allocation3], 1
    %s654 = scalar_lea.sflag [#allocation3], 1
    %655 = vsyncpa %s654, 1

</llo_original>
